<compile_context>
chip_gen: v5e
topology: v5e:2x2
jax: 0.10.0
libtpu: 0.0.40
codegen_flags: <defaults>
</compile_context>

<pallas_src>
import jax
import jax.numpy as jnp
from jax.experimental import pallas as pl
from jax.experimental.pallas import tpu as pltpu

_COMPUTE_DTYPE = jnp.bfloat16   # MXU operand dtype (native on v6e/v7x); accumulation f32.
_SUBLANE = 8


def _round_up(x, m):
    return (x + m - 1) // m * m


def _silu(x):
    # exp already runs on the EUP (its own VLIW slot); route the 1/(1+e) through the EUP
    # too (approx vrcp) instead of a VALU divide.  Error ~2^-12, well inside tolerance.
    return x * pl.reciprocal(1.0 + jnp.exp(-x), approx=True)


def _graph_and_cproj_kernel(z_ref, cond_ref,
                            gw1x_ref, gw1c_ref, gb1_ref, gw2_ref, gb2_ref,
                            nw1c_ref,
                            z_out_ref, cproj_ref):
    """Graph MLP (tiny, whole arrays in VMEM) + hoisted node-path condition projection.

      z_out = SiLU(SiLU(Z_core @ W1x_g + condition @ W1c_g + b1_g) @ W2_g + b2_g)
      cproj = condition @ W1c_node   (bf16; bias b1_node is added post-gather, in f32,
                                      inside the node kernel — mathematically identical
                                      because the one-hot rows sum to 1)
    """
    cond = cond_ref[...].astype(_COMPUTE_DTYPE)

    z = z_ref[...].astype(_COMPUTE_DTYPE)
    z1 = (jnp.dot(z, gw1x_ref[...], preferred_element_type=jnp.float32)
          + jnp.dot(cond, gw1c_ref[...], preferred_element_type=jnp.float32)
          + gb1_ref[...])
    z1 = _silu(z1)
    z2 = (jnp.dot(z1.astype(_COMPUTE_DTYPE), gw2_ref[...],
                  preferred_element_type=jnp.float32) + gb2_ref[...])
    z2 = _silu(z2)
    z_out_ref[...] = z2.astype(z_out_ref.dtype)

    cproj_ref[...] = jnp.dot(cond, nw1c_ref[...],
                             preferred_element_type=jnp.float32).astype(cproj_ref.dtype)


def _node_kernel(h_ref, n2g_ref, cproj_ref,
                 nw1x_ref, nb1_ref, nw2_ref, nb2_ref,
                 h_out_ref):
    """Node MLP over a TM-row tile.

      c_gath = onehot(node2graph) @ cproj            (gather on the MXU; Ng is small)
      h1     = SiLU(h_core @ W1x + c_gath + b1)       (b1 added in f32, post-gather)
      h_out  = SiLU(h1 @ W2 + b2)

    Rows past V (ragged last grid block) read garbage and produce garbage results; they
    are dropped by the masked writeback of the clipped output block — do NOT start
    trusting those rows.
    """
    tm = h_ref.shape[0]
    ng = cproj_ref.shape[0]

    x = h_ref[...].astype(_COMPUTE_DTYPE)                               # (TM, Fx)
    idx = n2g_ref[...]                                                  # (TM, 1) int32
    iota = jax.lax.broadcasted_iota(jnp.int32, (tm, ng), 1)
    onehot = jnp.where(idx == iota, 1.0, 0.0).astype(_COMPUTE_DTYPE)    # (TM, Ng)

    c_gath = jnp.dot(onehot, cproj_ref[...],
                     preferred_element_type=jnp.float32)                # (TM, Fh) f32
    h1 = (jnp.dot(x, nw1x_ref[...], preferred_element_type=jnp.float32)
          + c_gath + nb1_ref[...])
    h1 = _silu(h1)
    # TODO(synk): dropout (p=0.0) omitted — identity at inference, not usable for training.
    h2 = (jnp.dot(h1.astype(_COMPUTE_DTYPE), nw2_ref[...],
                  preferred_element_type=jnp.float32) + nb2_ref[...])
    h2 = _silu(h2)
    h_out_ref[...] = h2.astype(h_out_ref.dtype)


def init_mlp_params(key, in_dim_x, in_dim_c, hidden_dim):
    """Params for block.Linear(in_x + in_c, hidden, SiLU) -> block.Linear(hidden, hidden, SiLU).

    W1 is stored already split into [x-part | condition-part] so the concat is never
    materialized.
    """
    k1, k2, k3, k4 = jax.random.split(key, 4)
    fan_in1 = in_dim_x + in_dim_c
    lim1 = 1.0 / jnp.sqrt(fan_in1)
    lim2 = 1.0 / jnp.sqrt(hidden_dim)
    w1 = jax.random.uniform(k1, (fan_in1, hidden_dim), jnp.float32, -lim1, lim1)
    b1 = jax.random.uniform(k2, (1, hidden_dim), jnp.float32, -lim1, lim1)
    w2 = jax.random.uniform(k3, (hidden_dim, hidden_dim), jnp.float32, -lim2, lim2)
    b2 = jax.random.uniform(k4, (1, hidden_dim), jnp.float32, -lim2, lim2)
    return {"w1x": w1[:in_dim_x, :], "w1c": w1[in_dim_x:, :],
            "b1": b1, "w2": w2, "b2": b2}


def pack_mlp_params(p):
    """One-time packing: matmul weights to bf16 (MXU operands); biases stay f32.
    No lane padding — outputs are emitted at their logical width (fewer HBM bytes)."""
    return {"w1x": p["w1x"].astype(_COMPUTE_DTYPE),
            "w1c": p["w1c"].astype(_COMPUTE_DTYPE),
            "b1":  p["b1"],
            "w2":  p["w2"].astype(_COMPUTE_DTYPE),
            "b2":  p["b2"]}


def condition_embedding_forward(packed_params, h_core, Z_core, condition, node2graph,
                                *, tm_cap=1024, out_dtype=None):
    """JAX/Pallas equivalent of ConditionEmbeddingModel.forward.

    Pass out_dtype=jnp.bfloat16 to halve output writeback if downstream tolerates it.
    """
    V, Fx = h_core.shape
    N, Fz = Z_core.shape
    _, Fc = condition.shape
    np_, gp = packed_params["node_mlp"], packed_params["graph_mlp"]
    Fh_n = np_["w2"].shape[1]
    Fh_g = gp["w2"].shape[1]
    if out_dtype is None:
        out_dtype = h_core.dtype

    if node2graph is None:
        # PyTorch's condition.repeat(V, 1) is only meaningful for a single graph.
        assert N == 1, "node2graph=None requires a single graph (N == 1)"
        node2graph = jnp.zeros((V,), jnp.int32)
    n2g = node2graph.astype(jnp.int32).reshape(V, 1)

    # ---------------- graph path + hoisted condition projection (micro kernel) --------
    # Tiny: whole arrays resident in VMEM, single invocation.  Row-padding to 8 is a few
    # rows only; the onehot gather in the node kernel never selects the padded rows.
    Ng_pad = _round_up(N, _SUBLANE)
    pad_rows = lambda a: jnp.pad(a, ((0, Ng_pad - a.shape[0]), (0, 0)))
    z_out_p, cproj = pl.pallas_call(
        _graph_and_cproj_kernel,
        out_shape=(jax.ShapeDtypeStruct((Ng_pad, Fh_g), out_dtype),
                   jax.ShapeDtypeStruct((Ng_pad, Fh_n), _COMPUTE_DTYPE)),
    )(pad_rows(Z_core), pad_rows(condition),
      gp["w1x"], gp["w1c"], gp["b1"], gp["w2"], gp["b2"], np_["w1c"])

    # ------------------------------- node path (tiled) --------------------------------
    # TM chosen so small inputs run in ONE grid step (e.g. V=300 -> TM=304, 1 step);
    # ragged last blocks are masked by Pallas, so no wrapper-side jnp.pad of h_core.
    TM = min(tm_cap, _round_up(V, _SUBLANE))
    grid = (pl.cdiv(V, TM),)

    resident = lambda r, c: pl.BlockSpec((r, c), lambda i: (0, 0))
    itemsize = jnp.dtype(out_dtype).itemsize
    cost = pl.CostEstimate(
        flops=int(2 * V * Fh_n * (Fx + Ng_pad + Fh_n)),
        transcendentals=int(2 * V * Fh_n),
        bytes_accessed=int(V * Fx * 4 + V * 4 + V * Fh_n * itemsize
                           + Ng_pad * Fh_n * 2
                           + (Fx + Fh_n) * Fh_n * 2 + 2 * Fh_n * 4),
    )

    h_out = pl.pallas_call(
        _node_kernel,
        out_shape=jax.ShapeDtypeStruct((V, Fh_n), out_dtype),
        grid=grid,
        in_specs=[
            pl.BlockSpec((TM, Fx), lambda i: (i, 0)),     # h_core tile        (TM, Fx)
            pl.BlockSpec((TM, 1), lambda i: (i, 0)),      # node2graph tile    (TM, 1)
            resident(Ng_pad, Fh_n),                       # cproj (bf16, resident)
            resident(Fx, Fh_n),                           # node W1x
            resident(1, Fh_n),                            # node b1 (f32)
            resident(Fh_n, Fh_n),                         # node W2
            resident(1, Fh_n),                            # node b2 (f32)
        ],
        out_specs=pl.BlockSpec((TM, Fh_n), lambda i: (i, 0)),
        compiler_params=pltpu.CompilerParams(
            # Node tiles are independent -> "parallel": shards across the 2 TCs on v7x
            # (no-op on the single-TC v5e/v6e).
            dimension_semantics=("parallel",),
            vmem_limit_bytes=32 * 1024 * 1024,
        ),
        cost_estimate=cost,
    )(h_core, n2g, cproj, np_["w1x"], np_["b1"], np_["w2"], np_["b2"])

    # Only the tiny graph output carries row padding (<= 7 extra rows); negligible slice.
    return h_out, z_out_p[:N]


def _reference_forward(params, h_core, Z_core, condition, node2graph):
    """Pure-JAX f32 reference (same math as the PyTorch module)."""
    def mlp(p, x, c):
        w1 = jnp.concatenate([p["w1x"], p["w1c"]], axis=0)
        h = jnp.concatenate([x, c], axis=-1) @ w1 + p["b1"]
        h = h * jax.nn.sigmoid(h)
        y = h @ p["w2"] + p["b2"]
        return y * jax.nn.sigmoid(y)
    h_cond = jnp.take(condition, node2graph, axis=0)
    return (mlp(params["node_mlp"], h_core, h_cond),
            mlp(params["graph_mlp"], Z_core, condition))


if __name__ == "__main__":
    core_node_vector_dim = 32
    core_graph_vector_dim = 32
    condition_dim = 16

    key = jax.random.PRNGKey(0)
    k_np, k_gp, k_data = jax.random.split(key, 3)
    params = {
        "node_mlp": init_mlp_params(k_np, core_node_vector_dim, condition_dim,
                                    core_node_vector_dim),
        "graph_mlp": init_mlp_params(k_gp, core_graph_vector_dim, condition_dim,
                                     core_graph_vector_dim),
    }
    packed = {
        "node_mlp": pack_mlp_params(params["node_mlp"]),
        "graph_mlp": pack_mlp_params(params["graph_mlp"]),
    }

    # Case 1: tiny (V=8, N=2)    — single exact grid step.
    # Case 2: (V=300, N=4)       — single ragged step (TM=304 > V).
    # Case 3: (V=2500, N=4)      — multi-step grid with a ragged last block.
    for (V, N) in ((8, 2), (300, 4), (2500, 4)):
        kh, kz, kc, kg, k_data = jax.random.split(k_data, 5)
        h_core = jax.random.normal(kh, (V, core_node_vector_dim), jnp.float32)
        Z_core = jax.random.normal(kz, (N, core_graph_vector_dim), jnp.float32)
        condition = jax.random.normal(kc, (N, condition_dim), jnp.float32)
        node2graph = jax.random.randint(kg, (V,), 0, N, jnp.int32)

        h_out, Z_out = condition_embedding_forward(packed, h_core, Z_core,
                                                   condition, node2graph)
        jax.block_until_ready((h_out, Z_out))

        h_ref, Z_ref = _reference_forward(params, h_core, Z_core, condition, node2graph)
        assert h_out.shape == (V, core_node_vector_dim)
        assert Z_out.shape == (N, core_graph_vector_dim)
        # Tolerance reflects bf16 MXU operands (f32 accumulation) + approx reciprocal
        # vs the f32 reference.
        assert jnp.allclose(h_out, h_ref, atol=5e-2, rtol=5e-2), \
            float(jnp.max(jnp.abs(h_out - h_ref)))
        assert jnp.allclose(Z_out, Z_ref, atol=5e-2, rtol=5e-2), \
            float(jnp.max(jnp.abs(Z_out - Z_ref)))

    print("KERNEL_OK")
</pallas_src>

<mosaic_0001>
module attributes {stable_mosaic.version = 11 : i64} {
  func.func @_graph_and_cproj_kernel(%arg0: memref<8x32xf32, #tpu.memory_space<vmem>>, %arg1: memref<8x16xf32, #tpu.memory_space<vmem>>, %arg2: memref<32x32xbf16, #tpu.memory_space<vmem>>, %arg3: memref<16x32xbf16, #tpu.memory_space<vmem>>, %arg4: memref<1x32xf32, #tpu.memory_space<vmem>>, %arg5: memref<32x32xbf16, #tpu.memory_space<vmem>>, %arg6: memref<1x32xf32, #tpu.memory_space<vmem>>, %arg7: memref<16x32xbf16, #tpu.memory_space<vmem>>, %arg8: memref<8x32xf32, #tpu.memory_space<vmem>>, %arg9: memref<8x32xbf16, #tpu.memory_space<vmem>>) attributes {dimension_semantics = [], scalar_prefetch = 0 : i64, scratch_operands = 0 : i64, tpu.core_type = #tpu.core_type<tc>} {
    %c0 = arith.constant 0 : index
    %c0_0 = arith.constant 0 : index
    %0 = vector.load %arg1[%c0, %c0_0] : memref<8x16xf32, #tpu.memory_space<vmem>>, vector<8x16xf32>
    %1 = arith.truncf %0 : vector<8x16xf32> to vector<8x16xbf16>
    %c0_1 = arith.constant 0 : index
    %c0_2 = arith.constant 0 : index
    %2 = vector.load %arg0[%c0_1, %c0_2] : memref<8x32xf32, #tpu.memory_space<vmem>>, vector<8x32xf32>
    %3 = arith.truncf %2 : vector<8x32xf32> to vector<8x32xbf16>
    %c0_3 = arith.constant 0 : index
    %c0_4 = arith.constant 0 : index
    %4 = vector.load %arg2[%c0_3, %c0_4] : memref<32x32xbf16, #tpu.memory_space<vmem>>, vector<32x32xbf16>
    %cst = arith.constant dense<0.000000e+00> : vector<8x32xf32>
    %5 = tpu.matmul %3, %4, %cst {dimension_numbers = #tpu.dot_dimension_numbers<[1], [0], [0], [1], [0, 0, 1, 1], [], []>} : vector<8x32xbf16>, vector<32x32xbf16>, vector<8x32xf32> -> vector<8x32xf32>
    %c0_5 = arith.constant 0 : index
    %c0_6 = arith.constant 0 : index
    %6 = vector.load %arg3[%c0_5, %c0_6] : memref<16x32xbf16, #tpu.memory_space<vmem>>, vector<16x32xbf16>
    %cst_7 = arith.constant dense<0.000000e+00> : vector<8x32xf32>
    %7 = tpu.matmul %1, %6, %cst_7 {dimension_numbers = #tpu.dot_dimension_numbers<[1], [0], [0], [1], [0, 0, 1, 1], [], []>} : vector<8x16xbf16>, vector<16x32xbf16>, vector<8x32xf32> -> vector<8x32xf32>
    %8 = arith.addf %5, %7 : vector<8x32xf32>
    %c0_8 = arith.constant 0 : index
    %c0_9 = arith.constant 0 : index
    %9 = vector.load %arg4[%c0_8, %c0_9] : memref<1x32xf32, #tpu.memory_space<vmem>>, vector<1x32xf32>
    %10 = vector.broadcast %9 : vector<1x32xf32> to vector<8x32xf32>
    %11 = arith.addf %8, %10 : vector<8x32xf32>
    %cst_10 = arith.constant 0.000000e+00 : f32
    %12 = vector.broadcast %cst_10 : f32 to vector<8x32xf32>
    %13 = arith.subf %12, %11 : vector<8x32xf32>
    %14 = math.exp %13 : vector<8x32xf32>
    %cst_11 = arith.constant 1.000000e+00 : f32
    %15 = vector.broadcast %cst_11 : f32 to vector<8x32xf32>
    %16 = arith.addf %15, %14 : vector<8x32xf32>
    %17 = tpu.reciprocal %16 {approx = true} : vector<8x32xf32> -> vector<8x32xf32>
    %18 = arith.mulf %11, %17 : vector<8x32xf32>
    %19 = arith.truncf %18 : vector<8x32xf32> to vector<8x32xbf16>
    %c0_12 = arith.constant 0 : index
    %c0_13 = arith.constant 0 : index
    %20 = vector.load %arg5[%c0_12, %c0_13] : memref<32x32xbf16, #tpu.memory_space<vmem>>, vector<32x32xbf16>
    %cst_14 = arith.constant dense<0.000000e+00> : vector<8x32xf32>
    %21 = tpu.matmul %19, %20, %cst_14 {dimension_numbers = #tpu.dot_dimension_numbers<[1], [0], [0], [1], [0, 0, 1, 1], [], []>} : vector<8x32xbf16>, vector<32x32xbf16>, vector<8x32xf32> -> vector<8x32xf32>
    %c0_15 = arith.constant 0 : index
    %c0_16 = arith.constant 0 : index
    %22 = vector.load %arg6[%c0_15, %c0_16] : memref<1x32xf32, #tpu.memory_space<vmem>>, vector<1x32xf32>
    %23 = vector.broadcast %22 : vector<1x32xf32> to vector<8x32xf32>
    %24 = arith.addf %21, %23 : vector<8x32xf32>
    %cst_17 = arith.constant 0.000000e+00 : f32
    %25 = vector.broadcast %cst_17 : f32 to vector<8x32xf32>
    %26 = arith.subf %25, %24 : vector<8x32xf32>
    %27 = math.exp %26 : vector<8x32xf32>
    %cst_18 = arith.constant 1.000000e+00 : f32
    %28 = vector.broadcast %cst_18 : f32 to vector<8x32xf32>
    %29 = arith.addf %28, %27 : vector<8x32xf32>
    %30 = tpu.reciprocal %29 {approx = true} : vector<8x32xf32> -> vector<8x32xf32>
    %31 = arith.mulf %24, %30 : vector<8x32xf32>
    %c0_19 = arith.constant 0 : index
    %c0_20 = arith.constant 0 : index
    %32 = vector.load %arg8[%c0_19, %c0_20] : memref<8x32xf32, #tpu.memory_space<vmem>>, vector<8x32xf32>
    tpu.vector_store %arg8[%c0_19, %c0_20], %31 {strides = array<i32>} : memref<8x32xf32, #tpu.memory_space<vmem>>, vector<8x32xf32>,
    %c0_21 = arith.constant 0 : index
    %c0_22 = arith.constant 0 : index
    %33 = vector.load %arg7[%c0_21, %c0_22] : memref<16x32xbf16, #tpu.memory_space<vmem>>, vector<16x32xbf16>
    %cst_23 = arith.constant dense<0.000000e+00> : vector<8x32xf32>
    %34 = tpu.matmul %1, %33, %cst_23 {dimension_numbers = #tpu.dot_dimension_numbers<[1], [0], [0], [1], [0, 0, 1, 1], [], []>} : vector<8x16xbf16>, vector<16x32xbf16>, vector<8x32xf32> -> vector<8x32xf32>
    %35 = arith.truncf %34 : vector<8x32xf32> to vector<8x32xbf16>
    %c0_24 = arith.constant 0 : index
    %c0_25 = arith.constant 0 : index
    %36 = vector.load %arg9[%c0_24, %c0_25] : memref<8x32xbf16, #tpu.memory_space<vmem>>, vector<8x32xbf16>
    tpu.vector_store %arg9[%c0_24, %c0_25], %35 {strides = array<i32>} : memref<8x32xbf16, #tpu.memory_space<vmem>>, vector<8x32xbf16>,
    return
  }
}

</mosaic_0001>

<llo_original>
// kernel: tpu_custom_call.1
$region0: #{tpu_custom_call.1}
  #allocation0 [shape = 'u32[]', space=smem, size = 0x4, offset = 0x4, fixed_abs, tag = 'smem constant byte address 0x4 - core index']
  #allocation1 [shape = 'u32[72,128]{1,0:T(1,128)}', space=vmem, size = 0x9000, scoped, tag = 'internal scratch']
  %s0 = inlined_call_operand.hbm [shape: f32[8,32], index: 0, kind: input, shape index: {}]
  %s1 = inlined_call_operand.hbm [shape: f32[8,16], index: 1, kind: input, shape index: {}]
  %s2 = inlined_call_operand.hbm [shape: bf16[32,32], index: 2, kind: input, shape index: {}]
  %s3 = inlined_call_operand.hbm [shape: bf16[16,32], index: 3, kind: input, shape index: {}]
  %s4 = inlined_call_operand.vmem [shape: f32[1,32], index: 4, kind: input, shape index: {}]
  %s5 = inlined_call_operand.hbm [shape: bf16[32,32], index: 5, kind: input, shape index: {}]
  %s6 = inlined_call_operand.vmem [shape: f32[1,32], index: 6, kind: input, shape index: {}]
  %s7 = inlined_call_operand.hbm [shape: bf16[16,32], index: 7, kind: input, shape index: {}]
  %s8 = inlined_call_operand.hbm [shape: f32[8,32], index: 8, kind: output, shape index: {0}]
  %s9 = inlined_call_operand.hbm [shape: bf16[8,32], index: 9, kind: output, shape index: {1}]
  %10 = xla_tuple %s8, %s9
  %s11 = sld [smem:[#allocation0]]
  $region74: #{tpu_custom_call.1} parent=0
    _
  %s13 = ssub.s32 1, %s11
  %s14 = scalar_select 0, %s13, %s11
  $region1: #{tpu_custom_call.1} parent=0
    #allocation2 [shape = 'u8[4096]{0}', space=vmem, size = 0x1000, scoped, tag = 'input window, operand 0, single buffered']
    #allocation3 [shape = 's32[1]{0}', space=sflag, size = 0x4, scoped, tag = 'scoped memory for tpu_custom_call.1']
    #allocation4 [shape = 's32[1]{0}', space=sflag, size = 0x4, scoped, tag = 'scoped memory for tpu_custom_call.1']
    #allocation5 [shape = 'u8[4096]{0}', space=vmem, size = 0x1000, scoped, tag = 'input window, operand 1, single buffered']
    #allocation6 [shape = 's32[1]{0}', space=sflag, size = 0x4, scoped, tag = 'scoped memory for tpu_custom_call.1']
    #allocation7 [shape = 'u8[8192]{0}', space=vmem, size = 0x2000, scoped, tag = 'input window, operand 2, single buffered']
    #allocation8 [shape = 'u8[4096]{0}', space=vmem, size = 0x1000, scoped, tag = 'input window, operand 3, single buffered']
    #allocation9 [shape = 's32[1]{0}', space=sflag, size = 0x4, scoped, tag = 'scoped memory for tpu_custom_call.1']
    #allocation10 [shape = 'u8[8192]{0}', space=vmem, size = 0x2000, scoped, tag = 'input window, operand 5, single buffered']
    #allocation11 [shape = 'u8[4096]{0}', space=vmem, size = 0x1000, scoped, tag = 'input window, operand 7, single buffered']
    #allocation12 [shape = 's32[1]{0}', space=sflag, size = 0x4, scoped, tag = 'scoped memory for tpu_custom_call.1']
    #allocation13 [shape = 'u8[4096]{0}', space=vmem, size = 0x1000, scoped, tag = 'output window, operand 0, single buffered']
    #allocation14 [shape = 'u8[2048]{0}', space=vmem, size = 0x800, scoped, tag = 'output window, operand 1, single buffered']
    #allocation15 [shape = 's32[1]{0}', space=sflag, size = 0x4, scoped, tag = 'scoped memory for tpu_custom_call.1']
    %15 = vsyncpa [#allocation3], 0
    %16 = vsyncpa [#allocation6], 0
    %17 = vsyncpa [#allocation9], 0
    %18 = vsyncpa [#allocation12], 0
    %19 = vsyncpa [#allocation4], 0
    %20 = vsyncpa [#allocation15], 0
    // Predicated region
    $region2: #{tpu_custom_call.1} parent=1 // pred_check
      _
    $region3: #{tpu_custom_call.1} parent=1 // pred_check_branch
      %22 = sbr.rel (0) target = $region5
    $region4: #{tpu_custom_call.1} parent=1 // pred_region
      %24 = vsyncadd [#allocation3], 0
      %s26 = sshll.u32 %s0, 4
      %s27 = int_to_ptr.hbm [resolvable:$true] %s26
      %s28 = sshll.u32 [#allocation2], 4
      %s29 = int_to_ptr.vmem [resolvable:$true] %s28
      %31 = dma.hbm_to_vmem [thread:$0]  %s27, 128, %s29, [#allocation3]
    $region5: #{tpu_custom_call.1} parent=1 // pred_fallthru
      _
    // Predicated region
    $region6: #{tpu_custom_call.1} parent=1 // pred_check
      _
    $region7: #{tpu_custom_call.1} parent=1 // pred_check_branch
      %33 = sbr.rel (0) target = $region9
    $region8: #{tpu_custom_call.1} parent=1 // pred_region
      %35 = vsyncadd [#allocation6], 0
      %s37 = sshll.u32 %s1, 4
      %s38 = int_to_ptr.hbm [resolvable:$true] %s37
      %s39 = sshll.u32 [#allocation5], 4
      %s40 = int_to_ptr.vmem [resolvable:$true] %s39
      %42 = dma.hbm_to_vmem [thread:$0]  %s38, 128, %s40, [#allocation6]
    $region9: #{tpu_custom_call.1} parent=1 // pred_fallthru
      _
    // Predicated region
    $region10: #{tpu_custom_call.1} parent=1 // pred_check
      _
    $region11: #{tpu_custom_call.1} parent=1 // pred_check_branch
      %44 = sbr.rel (0) target = $region13
    $region12: #{tpu_custom_call.1} parent=1 // pred_region
      %46 = vsyncadd [#allocation6], 0
      %s47 = sshll.u32 %s2, 4
      %s48 = int_to_ptr.hbm [resolvable:$true] %s47
      %s49 = sshll.u32 [#allocation7], 4
      %s50 = int_to_ptr.vmem [resolvable:$true] %s49
      %55 = dma.hbm_to_vmem [thread:$0]  %s48, 256, %s50, [#allocation6], 64, 64, 4
    $region13: #{tpu_custom_call.1} parent=1 // pred_fallthru
      _
    // Predicated region
    $region14: #{tpu_custom_call.1} parent=1 // pred_check
      _
    $region15: #{tpu_custom_call.1} parent=1 // pred_check_branch
      %57 = sbr.rel (0) target = $region17
    $region16: #{tpu_custom_call.1} parent=1 // pred_region
      %59 = vsyncadd [#allocation9], 0
      %s60 = sshll.u32 %s3, 4
      %s61 = int_to_ptr.hbm [resolvable:$true] %s60
      %s62 = sshll.u32 [#allocation8], 4
      %s63 = int_to_ptr.vmem [resolvable:$true] %s62
      %68 = dma.hbm_to_vmem [thread:$0]  %s61, 128, %s63, [#allocation9], 64, 64, 4
    $region17: #{tpu_custom_call.1} parent=1 // pred_fallthru
      _
    // Predicated region
    $region18: #{tpu_custom_call.1} parent=1 // pred_check
      _
    $region19: #{tpu_custom_call.1} parent=1 // pred_check_branch
      %70 = sbr.rel (0) target = $region21
    $region20: #{tpu_custom_call.1} parent=1 // pred_region
      _
    $region21: #{tpu_custom_call.1} parent=1 // pred_fallthru
      _
    // Predicated region
    $region22: #{tpu_custom_call.1} parent=1 // pred_check
      _
    $region23: #{tpu_custom_call.1} parent=1 // pred_check_branch
      %72 = sbr.rel (0) target = $region25
    $region24: #{tpu_custom_call.1} parent=1 // pred_region
      %74 = vsyncadd [#allocation9], 0
      %s75 = sshll.u32 %s5, 4
      %s76 = int_to_ptr.hbm [resolvable:$true] %s75
      %s77 = sshll.u32 [#allocation10], 4
      %s78 = int_to_ptr.vmem [resolvable:$true] %s77
      %83 = dma.hbm_to_vmem [thread:$0]  %s76, 256, %s78, [#allocation9], 64, 64, 4
    $region25: #{tpu_custom_call.1} parent=1 // pred_fallthru
      _
    // Predicated region
    $region26: #{tpu_custom_call.1} parent=1 // pred_check
      _
    $region27: #{tpu_custom_call.1} parent=1 // pred_check_branch
      %85 = sbr.rel (0) target = $region29
    $region28: #{tpu_custom_call.1} parent=1 // pred_region
      _
    $region29: #{tpu_custom_call.1} parent=1 // pred_fallthru
      _
    // Predicated region
    $region30: #{tpu_custom_call.1} parent=1 // pred_check
      _
    $region31: #{tpu_custom_call.1} parent=1 // pred_check_branch
      %87 = sbr.rel (0) target = $region33
    $region32: #{tpu_custom_call.1} parent=1 // pred_region
      %89 = vsyncadd [#allocation12], 0
      %s90 = sshll.u32 %s7, 4
      %s91 = int_to_ptr.hbm [resolvable:$true] %s90
      %s92 = sshll.u32 [#allocation11], 4
      %s93 = int_to_ptr.vmem [resolvable:$true] %s92
      %98 = dma.hbm_to_vmem [thread:$0]  %s91, 128, %s93, [#allocation12], 64, 64, 4
    $region33: #{tpu_custom_call.1} parent=1 // pred_fallthru
      _
    // Predicated region
    $region34: #{tpu_custom_call.1} parent=1 // pred_check
      _
    $region35: #{tpu_custom_call.1} parent=1 // pred_check_branch
      %100 = sbr.rel (0) target = $region37
    $region36: #{tpu_custom_call.1} parent=1 // pred_region
      %102 = dma.done [#allocation3], 128
    $region37: #{tpu_custom_call.1} parent=1 // pred_fallthru
      _
    // Predicated region
    $region38: #{tpu_custom_call.1} parent=1 // pred_check
      _
    $region39: #{tpu_custom_call.1} parent=1 // pred_check_branch
      %104 = sbr.rel (0) target = $region41
    $region40: #{tpu_custom_call.1} parent=1 // pred_region
      %106 = dma.done [#allocation6], 128
    $region41: #{tpu_custom_call.1} parent=1 // pred_fallthru
      _
    // Predicated region
    $region42: #{tpu_custom_call.1} parent=1 // pred_check
      _
    $region43: #{tpu_custom_call.1} parent=1 // pred_check_branch
      %108 = sbr.rel (0) target = $region45
    $region44: #{tpu_custom_call.1} parent=1 // pred_region
      %110 = dma.done [#allocation6], 256
    $region45: #{tpu_custom_call.1} parent=1 // pred_fallthru
      _
    // Predicated region
    $region46: #{tpu_custom_call.1} parent=1 // pred_check
      _
    $region47: #{tpu_custom_call.1} parent=1 // pred_check_branch
      %112 = sbr.rel (0) target = $region49
    $region48: #{tpu_custom_call.1} parent=1 // pred_region
      %114 = dma.done [#allocation9], 128
    $region49: #{tpu_custom_call.1} parent=1 // pred_fallthru
      _
    // Predicated region
    $region50: #{tpu_custom_call.1} parent=1 // pred_check
      _
    $region51: #{tpu_custom_call.1} parent=1 // pred_check_branch
      %116 = sbr.rel (0) target = $region53
    $region52: #{tpu_custom_call.1} parent=1 // pred_region
      %118 = dma.done [#allocation9], 256
    $region53: #{tpu_custom_call.1} parent=1 // pred_fallthru
      _
    // Predicated region
    $region54: #{tpu_custom_call.1} parent=1 // pred_check
      _
    $region55: #{tpu_custom_call.1} parent=1 // pred_check_branch
      %120 = sbr.rel (0) target = $region57
    $region56: #{tpu_custom_call.1} parent=1 // pred_region
      %122 = dma.done [#allocation12], 128
    $region57: #{tpu_custom_call.1} parent=1 // pred_fallthru
      _
    %v124 = vld [vmem:[#allocation5] sm:$0xff]
    %v125 = vpack.c.bf16 %v124, %v124
    %v126 = vld [vmem:[#allocation2] sm:$0xff]
    %v127 = vpack.c.bf16 %v126, %v126
    %v128 = vld [vmem:[#allocation7] sm:$0xf]
    %v129 = vld [vmem:[#allocation7 + $0x4] sm:$0xf]
    %v130 = vld [vmem:[#allocation7 + $0x8] sm:$0xf]
    %v131 = vld [vmem:[#allocation7 + $0xc] sm:$0xf]
    %v132 = vld [vmem:[#allocation8] sm:$0xf]
    %v133 = vld [vmem:[#allocation8 + $0x4] sm:$0xf]
    %v136 = vunpack.c.l.b16 %v132
    %v137 = vunpack.c.l.b16 %v133
    %v138 = vpack.c.b16 %v137, %v136
    %vm140 = vcmask 130048
    %v142 = vsel %vm140, %v125, 0
    %144 = vmatpush.bf16.msra.mxu0 0
    %145 = vmatpush.bf16.msra.mxu0 0
    %146 = vmatpush.bf16.msra.mxu0 0
    %147 = vmatpush.bf16.msra.mxu0 0
    %148 = vmatpush.bf16.msra.mxu0 0
    %149 = vmatpush.bf16.msra.mxu0 0
    %150 = vmatpush.bf16.msra.mxu0 0
    %151 = vmatpush.bf16.msra.mxu0 %v138
    %152 = vmatmul.bf16.gmra.mxu0 %v142
    %v153 = vpop.f32.mrf.mxu0
    %v154 = vadd.f32 0.0, %v153
    %v155 = vpop.f32.mrf.mxu0
    %156 = vdwg.mxu0
    %v161 = vunpack.c.l.b16 %v128
    %v162 = vunpack.c.l.b16 %v129
    %v163 = vunpack.c.l.b16 %v130
    %v164 = vunpack.c.l.b16 %v131
    %v165 = vpack.c.b16 %v162, %v161
    %v166 = vpack.c.b16 %v164, %v163
    %vm169 = vcmask 261120
    %v171 = vsel %vm169, %v127, 0
    %173 = vmatpush.bf16.msra.mxu0 0
    %174 = vmatpush.bf16.msra.mxu0 0
    %175 = vmatpush.bf16.msra.mxu0 0
    %176 = vmatpush.bf16.msra.mxu0 0
    %177 = vmatpush.bf16.msra.mxu0 0
    %178 = vmatpush.bf16.msra.mxu0 0
    %179 = vmatpush.bf16.msra.mxu0 %v166
    %180 = vmatpush.bf16.msra.mxu0 %v165
    %181 = vmatmul.bf16.gmra.mxu0 %v171
    %v182 = vpop.f32.mrf.mxu0
    %v183 = vadd.f32 %v154, %v182
    %v184 = vpop.f32.mrf.mxu0
    %185 = vdwg.mxu0
    %v186 = vld [vmem:[%s4] sm:$0x1]
    %v188 = vperm.slane %v186, 0
    %v190 = vadd.f32 %v183, %v188
    %v191 = vsub.f32 0.0, %v190
    %v192 = vmul.f32 %v191, 1.442695
    %v193 = vpow.pop %v192
    %v194 = vadd.f32 %v193, 1.0
    %v195 = vrcp.pop %v194
    %v196 = vmul.f32 %v190, %v195
    %v197 = vpack.c.bf16 %v196, %v196
    %v198 = vld [vmem:[#allocation10] sm:$0xf]
    %v199 = vld [vmem:[#allocation10 + $0x4] sm:$0xf]
    %v200 = vld [vmem:[#allocation10 + $0x8] sm:$0xf]
    %v201 = vld [vmem:[#allocation10 + $0xc] sm:$0xf]
    %v202 = vld [vmem:[%s6] sm:$0x1]
    %v204 = vperm.slane %v202, 0
    %v210 = vunpack.c.l.b16 %v198
    %v211 = vunpack.c.l.b16 %v199
    %v212 = vunpack.c.l.b16 %v200
    %v213 = vunpack.c.l.b16 %v201
    %v214 = vpack.c.b16 %v211, %v210
    %v215 = vpack.c.b16 %v213, %v212
    %v219 = vsel %vm169, %v197, 0
    %221 = vmatpush.bf16.msra.mxu0 0
    %222 = vmatpush.bf16.msra.mxu0 0
    %223 = vmatpush.bf16.msra.mxu0 0
    %224 = vmatpush.bf16.msra.mxu0 0
    %225 = vmatpush.bf16.msra.mxu0 0
    %226 = vmatpush.bf16.msra.mxu0 0
    %227 = vmatpush.bf16.msra.mxu0 %v215
    %228 = vmatpush.bf16.msra.mxu0 %v214
    %229 = vmatmul.bf16.gmra.mxu0 %v219
    %v230 = vpop.f32.mrf.mxu0
    %v231 = vadd.f32 %v204, %v230
    %v232 = vpop.f32.mrf.mxu0
    %233 = vdwg.mxu0
    %v234 = vsub.f32 0.0, %v231
    %v235 = vmul.f32 %v234, 1.442695
    %v236 = vpow.pop %v235
    %v237 = vadd.f32 %v236, 1.0
    %v238 = vrcp.pop %v237
    %v239 = vmul.f32 %v231, %v238
    %240 = vst.msk [vmem:[#allocation13] sm:$0xff] %vm169, %v239
    %v241 = vld [vmem:[#allocation11] sm:$0xf]
    %v242 = vld [vmem:[#allocation11 + $0x4] sm:$0xf]
    %v245 = vunpack.c.l.b16 %v241
    %v246 = vunpack.c.l.b16 %v242
    %v247 = vpack.c.b16 %v246, %v245
    %249 = vmatpush.bf16.msra.mxu0 0
    %250 = vmatpush.bf16.msra.mxu0 0
    %251 = vmatpush.bf16.msra.mxu0 0
    %252 = vmatpush.bf16.msra.mxu0 0
    %253 = vmatpush.bf16.msra.mxu0 0
    %254 = vmatpush.bf16.msra.mxu0 0
    %255 = vmatpush.bf16.msra.mxu0 0
    %256 = vmatpush.bf16.msra.mxu0 %v247
    %257 = vmatmul.bf16.gmra.mxu0 %v142
    %v258 = vpop.f32.mrf.mxu0
    %v259 = vadd.f32 0.0, %v258
    %v260 = vpop.f32.mrf.mxu0
    %261 = vdwg.mxu0
    %v262 = vpack.c.bf16 %v259, %v259
    %vm263 = vcmask 257024
    %264 = vst.msk [vmem:[#allocation14] sm:$0xf] %vm263, %v262
    // Predicated region
    $region58: #{tpu_custom_call.1} parent=1 // pred_check
      _
    $region59: #{tpu_custom_call.1} parent=1 // pred_check_branch
      %266 = sbr.rel (0) target = $region61
    $region60: #{tpu_custom_call.1} parent=1 // pred_region
      %268 = vsyncadd [#allocation4], 0
      %s270 = sshll.u32 [#allocation13], 4
      %s271 = int_to_ptr.vmem [resolvable:$true] %s270
      %s272 = sshll.u32 %s8, 4
      %s273 = int_to_ptr.hbm [resolvable:$true] %s272
      %275 = dma.vmem_to_hbm [thread:$0]  %s271, 128, %s273, [#allocation4]
    $region61: #{tpu_custom_call.1} parent=1 // pred_fallthru
      _
    // Predicated region
    $region62: #{tpu_custom_call.1} parent=1 // pred_check
      _
    $region63: #{tpu_custom_call.1} parent=1 // pred_check_branch
      %277 = sbr.rel (0) target = $region65
    $region64: #{tpu_custom_call.1} parent=1 // pred_region
      %279 = vsyncadd [#allocation15], 0
      %s281 = sshll.u32 [#allocation14], 4
      %s282 = int_to_ptr.vmem [resolvable:$true] %s281
      %s283 = sshll.u32 %s9, 4
      %s284 = int_to_ptr.hbm [resolvable:$true] %s283
      %286 = dma.vmem_to_hbm [thread:$0]  %s282, 64, %s284, [#allocation15]
    $region65: #{tpu_custom_call.1} parent=1 // pred_fallthru
      _
    // Predicated region
    $region66: #{tpu_custom_call.1} parent=1 // pred_check
      _
    $region67: #{tpu_custom_call.1} parent=1 // pred_check_branch
      %288 = sbr.rel (0) target = $region69
    $region68: #{tpu_custom_call.1} parent=1 // pred_region
      %290 = dma.done [#allocation4], 128
    $region69: #{tpu_custom_call.1} parent=1 // pred_fallthru
      _
    // Predicated region
    $region70: #{tpu_custom_call.1} parent=1 // pred_check
      _
    $region71: #{tpu_custom_call.1} parent=1 // pred_check_branch
      %292 = sbr.rel (0) target = $region73
    $region72: #{tpu_custom_call.1} parent=1 // pred_region
      %294 = dma.done [#allocation15], 64
    $region73: #{tpu_custom_call.1} parent=1 // pred_fallthru
      _
    %295 = vsyncpa [#allocation3], 1
    %296 = vsyncpa [#allocation6], 1
    %297 = vsyncpa [#allocation9], 1
    %298 = vsyncpa [#allocation12], 1
    %299 = vsyncpa [#allocation4], 1
    %300 = vsyncpa [#allocation15], 1

</llo_original>
